<compile_context>
chip_gen: v5e
topology: v5e:2x2
jax: 0.10.0
libtpu: 0.0.40
codegen_flags: <defaults>
</compile_context>

<pallas_src>
import math
from functools import partial

import jax
import jax.numpy as jnp
from jax import lax
from jax.experimental import pallas as pl
from jax.experimental.pallas import tpu as pltpu

# Small, self-consistent shapes implied by the module's forward pass.
B = 2            # batch
N = 8            # num_neurons == input_size (seq length for attention)
D_MODEL = 32
N_HEAD = 4
D_HEAD = D_MODEL // N_HEAD
MAX_LEN = 16
HIDDEN = 16      # must be a perfect square -> h = 4

_W_COLS = 2 * D_MODEL + N_HEAD     # packed [Wq*scale | Wk | Wv·(Wo·unemb)_head] = 68

# ---- packed constant slab layout (rows x 128 lanes, all sections 8-row aligned) ----
SLAB_LANES = 128
R_MISC = 0                         # row 0: emb_w (lanes 0..31), folded output bias b_ou (lane 32)
R_POS = 8                          # rows 8..23 : (pos + emb_b) tiled over batch  (B*N, 32)
R_W = 24                           # rows 24..55: [Wq*scale | Wk | W_vu]          (32, 68)
R_WB = R_W + D_MODEL               # row 56     : packed biases                   (1, 68)
R_FF = 64                          # rows 64..71: ff1_w                           (8, 16)
R_FFB = R_FF + N                   # row 72     : ff1_b                           (1, 16)
R_M = 80                           # rows 80..111 : block-diag ones (softmax den) (32, 32)
R_BD4 = R_M + N_HEAD * N           # rows 112..143: head-select mask              (32, 4)
SLAB_ROWS = R_BD4 + N_HEAD * N     # 144

# ---- packed output layout ----
_OUT_LANES = 128                   # lane-dense output width (unmasked vst)
_OUT_ROWS = 24                     # rows 0..15 attention (B*N), rows 16..17 [z | x_atten], pad to 24
assert HIDDEN + N <= _OUT_LANES


def _attn_kernel(x_ref, s_ref, out_ref, *, threshold, is_greater):
    # x_ref   : (B*N, 1)           both batches' inputs, stacked on sublanes
    # s_ref   : (SLAB_ROWS, 128)   packed constants / weights (see layout above)
    # out_ref : (_OUT_ROWS, 128)   rows 0..B*N-1 = attention (heads packed on lanes),
    #                              rows B*N..B*N+B-1 = [z | x_atten | 0], rest zero padding
    x_flat = x_ref[...]                                            # (16, 1)

    emb_w = s_ref[R_MISC:R_MISC + 1, 0:D_MODEL]                    # (1, 32)
    b_ou = s_ref[R_MISC:R_MISC + 1, D_MODEL:D_MODEL + 1]           # (1, 1)
    pos2 = s_ref[R_POS:R_POS + B * N, 0:D_MODEL]                   # (16, 32) pos + emb_b, tiled
    w_all = s_ref[R_W:R_W + D_MODEL, 0:_W_COLS]                    # (32, 68)
    b_all = s_ref[R_WB:R_WB + 1, 0:_W_COLS]                        # (1, 68)
    f_w = s_ref[R_FF:R_FF + N, 0:HIDDEN]                           # (8, 16)
    f_b = s_ref[R_FFB:R_FFB + 1, 0:HIDDEN]                         # (1, 16)
    m_bd = s_ref[R_M:R_M + N_HEAD * N, 0:N_HEAD * N]               # (32, 32) block-diag ones
    bd4 = s_ref[R_BD4:R_BD4 + N_HEAD * N, 0:N_HEAD]                # (32, 4)  head-select mask

    # Embedding (rank-1 broadcast multiply on the VPU) + positional encoding, both batches.
    h_emb = x_flat * emb_w + pos2                                  # (16, 32)

    # One fused projection for q (pre-scaled), k, and the folded value path u.
    hw = jnp.dot(h_emb, w_all, preferred_element_type=jnp.float32) + b_all   # (16, 68)

    # Per-head, per-batch scores packed lane-dense:  row b*N+i, lane h*N+j = q_h(i)·k_h(j).
    s_rows = []
    for b in range(B):                                             # static loop, B = 2
        hw_b = hw[b * N:(b + 1) * N, :]
        blocks = []
        for h in range(N_HEAD):                                    # static loop, N_HEAD = 4
            lo = h * D_HEAD
            q_h = hw_b[:, lo:lo + D_HEAD]
            k_h = hw_b[:, D_MODEL + lo:D_MODEL + lo + D_HEAD]
            # q @ k^T without an explicit transpose (1/sqrt(d_head) folded into Wq / bq).
            blocks.append(lax.dot_general(q_h, k_h, (((1,), (1,)), ((), ())),
                                          preferred_element_type=jnp.float32))
        s_rows.append(jnp.concatenate(blocks, axis=-1))            # (8, 32)
    s_all = jnp.concatenate(s_rows, axis=0)                        # (16, 32)

    # Single softmax pass across all heads and batches.  Subtracting the row-GLOBAL max is
    # exact: within each head's 8 lanes it is a constant per-row shift.
    s_all = s_all - jnp.max(s_all, axis=-1, keepdims=True)
    ee = jnp.exp(s_all)                                            # one EUP pass
    den = jnp.dot(ee, m_bd, preferred_element_type=jnp.float32)    # per-head row sums, expanded
    # approx=False keeps the post-softmax threshold comparison exact vs. the reference.
    attn = ee * pl.reciprocal(den, approx=False)                   # (16, 32)
    if is_greater:                                                 # static: kernel is specialized
        attn = jnp.where(attn > threshold, attn, 0.0)
    else:
        attn = jnp.where(attn < threshold, attn, 0.0)

    # Folded value / output-projection / unEmbedding path:
    #   y_b = attn_b @ u_flat_b,   u_flat_b[h*N+j] = (v_b @ (Wo·unemb))_head[j, h]
    u_cols = []
    for b in range(B):
        u_b = hw[b * N:(b + 1) * N, 2 * D_MODEL:2 * D_MODEL + N_HEAD]   # (8, 4)
        u_tiled = jnp.concatenate([u_b] * N_HEAD, axis=0)               # (32, 4)
        u_cols.append(jnp.sum(u_tiled * bd4, axis=-1, keepdims=True))   # (32, 1)
    u2 = jnp.concatenate(u_cols, axis=-1)                               # (32, 2)
    y2 = jnp.dot(attn, u2, preferred_element_type=jnp.float32)          # (16, 2)
    y_rows = [jnp.transpose(y2[b * N:(b + 1) * N, b:b + 1]) for b in range(B)]  # 2 x (1, 8)
    y_both = jnp.concatenate(y_rows, axis=0) + b_ou                     # (2, 8) == x_atten

    z_both = jnp.dot(y_both, f_w, preferred_element_type=jnp.float32) + f_b     # (2, 16)

    # Lane-dense, sublane-aligned stores (no partial-lane masked writes).
    att_pad = jnp.zeros((B * N, _OUT_LANES - N_HEAD * N), jnp.float32)
    out_ref[0:B * N, :] = jnp.concatenate([attn, att_pad], axis=-1)              # (16, 128)
    tail = jnp.concatenate(
        [z_both, y_both, jnp.zeros((B, _OUT_LANES - HIDDEN - N), jnp.float32)], axis=-1)  # (2, 128)
    tail_block = jnp.concatenate(
        [tail, jnp.zeros((_OUT_ROWS - B * N - B, _OUT_LANES), jnp.float32)], axis=0)      # (8, 128)
    out_ref[B * N:_OUT_ROWS, :] = tail_block


def build_slab(p):
    """Fold / pack all weights ONCE into a single 128-lane slab (hoisted out of the call path)."""
    scale = 1.0 / math.sqrt(D_HEAD)

    # Fold output projection + unEmbedding into the value path (per-head block-diagonal fold):
    #   y = concat_h(attn_h @ v_h) @ (Wo @ unemb_w) + (bo @ unemb_w + unemb_b)
    w_ou = p["wo"] @ p["unemb_w"]                                   # (D, 1)
    b_ou = p["bo"] @ p["unemb_w"] + p["unemb_b"]                    # (1, 1)
    head_of_dim = jnp.arange(D_MODEL) // D_HEAD
    bd_mask = (head_of_dim[:, None] == jnp.arange(N_HEAD)[None, :]).astype(jnp.float32)
    w_ou_bd = w_ou * bd_mask                                        # (D, NH)
    w_vu = p["wv"] @ w_ou_bd                                        # (D, NH)
    b_vu = p["bv"] @ w_ou_bd                                        # (1, NH)

    w_all = jnp.concatenate([p["wq"] * scale, p["wk"], w_vu], axis=1)   # (32, 68)
    b_all = jnp.concatenate([p["bq"] * scale, p["bk"], b_vu], axis=1)   # (1, 68)

    lane = jnp.arange(N_HEAD * N)
    m_bd = (lane[:, None] // N == lane[None, :] // N).astype(jnp.float32)          # (32, 32)
    bd4 = (lane[:, None] // N == jnp.arange(N_HEAD)[None, :]).astype(jnp.float32)  # (32, 4)

    slab = jnp.zeros((SLAB_ROWS, SLAB_LANES), jnp.float32)
    slab = slab.at[R_MISC, 0:D_MODEL].set(p["emb_w"][0])
    slab = slab.at[R_MISC, D_MODEL].set(b_ou[0, 0])
    slab = slab.at[R_POS:R_POS + B * N, 0:D_MODEL].set(jnp.tile(p["pos"] + p["emb_b"], (B, 1)))
    slab = slab.at[R_W:R_W + D_MODEL, 0:_W_COLS].set(w_all)
    slab = slab.at[R_WB, 0:_W_COLS].set(b_all[0])
    slab = slab.at[R_FF:R_FF + N, 0:HIDDEN].set(p["ff1_w"])
    slab = slab.at[R_FFB, 0:HIDDEN].set(p["ff1_b"][0])
    slab = slab.at[R_M:R_M + N_HEAD * N, 0:N_HEAD * N].set(m_bd)
    slab = slab.at[R_BD4:R_BD4 + N_HEAD * N, 0:N_HEAD].set(bd4)
    return slab


def attention_forward(x, threshold, is_greater, slab):
    x_flat = x.reshape(B * N, 1).astype(jnp.float32)

    kernel = partial(_attn_kernel, threshold=float(threshold), is_greater=bool(is_greater))

    out = pl.pallas_call(
        kernel,
        out_shape=jax.ShapeDtypeStruct((_OUT_ROWS, _OUT_LANES), jnp.float32),
        grid_spec=pltpu.PrefetchScalarGridSpec(
            num_scalar_prefetch=0,
            grid=(1,),                                             # single kernel step (B collapsed)
            in_specs=[
                pl.BlockSpec((B * N, 1), lambda i: (0, 0)),        # x, both batches stacked
                pl.BlockSpec((SLAB_ROWS, SLAB_LANES), lambda i: (0, 0)),  # packed weight slab
            ],
            out_specs=pl.BlockSpec((_OUT_ROWS, _OUT_LANES), lambda i: (0, 0)),
        ),
        compiler_params=pltpu.CompilerParams(dimension_semantics=("arbitrary",)),
    )(x_flat, slab)

    atten = out[:B * N, :N_HEAD * N].reshape(B, N, N_HEAD, N).transpose(0, 2, 1, 3)  # (B,NH,N,N)
    tail = out[B * N:B * N + B, :]
    z = tail[:, :HIDDEN]                                            # (B, HIDDEN)
    x_atten = tail[:, HIDDEN:HIDDEN + N]                            # (B, N)

    h_side = int(math.sqrt(HIDDEN))
    x_img = z.reshape(-1, 1, h_side, h_side)     # matches x.reshape(-1, 1, h, h)
    attention_weights = jnp.squeeze(atten)       # matches atten.squeeze()
    return x_img, attention_weights, x_atten


def _reference(x, threshold, is_greater, p):
    """Plain-JAX reference of the same forward pass (unfused), for verification."""
    e = x[..., None] @ p["emb_w"] + p["emb_b"]                  # (B,N,D)
    h = e + p["pos"][None]
    q = h @ p["wq"] + p["bq"]
    k = h @ p["wk"] + p["bk"]
    v = h @ p["wv"] + p["bv"]

    def split(t):
        return t.reshape(B, N, N_HEAD, D_HEAD).transpose(0, 2, 1, 3)

    qh, kh, vh = split(q), split(k), split(v)
    s = (qh @ kh.transpose(0, 1, 3, 2)) / math.sqrt(D_HEAD)
    attn = jax.nn.softmax(s, axis=-1)
    keep = (attn > threshold) if is_greater else (attn < threshold)
    attn = jnp.where(keep, attn, 0.0)
    o = (attn @ vh).transpose(0, 2, 1, 3).reshape(B, N, D_MODEL)
    o = o @ p["wo"] + p["bo"]
    y = (o @ p["unemb_w"] + p["unemb_b"])[..., 0]               # (B, N)
    z = y @ p["ff1_w"] + p["ff1_b"]                             # (B, HIDDEN)
    h_side = int(math.sqrt(HIDDEN))
    return z.reshape(-1, 1, h_side, h_side), jnp.squeeze(attn), y


if __name__ == "__main__":
    key = jax.random.PRNGKey(0)
    ks = jax.random.split(key, 16)

    def rnd(k, shape):
        return (0.1 * jax.random.normal(k, shape)).astype(jnp.float32)

    # Sinusoidal positional encoding table, first N rows used.
    position = jnp.arange(MAX_LEN, dtype=jnp.float32)[:, None]
    div = jnp.exp(jnp.arange(0, D_MODEL, 2, dtype=jnp.float32)
                  * (-math.log(10000.0) / D_MODEL))
    pe = jnp.zeros((MAX_LEN, D_MODEL), jnp.float32)
    pe = pe.at[:, 0::2].set(jnp.sin(position * div))
    pe = pe.at[:, 1::2].set(jnp.cos(position * div))

    params = dict(
        pos=pe[:N],
        emb_w=rnd(ks[0], (1, D_MODEL)), emb_b=rnd(ks[1], (1, D_MODEL)),
        wq=rnd(ks[2], (D_MODEL, D_MODEL)), bq=rnd(ks[3], (1, D_MODEL)),
        wk=rnd(ks[4], (D_MODEL, D_MODEL)), bk=rnd(ks[5], (1, D_MODEL)),
        wv=rnd(ks[6], (D_MODEL, D_MODEL)), bv=rnd(ks[7], (1, D_MODEL)),
        wo=rnd(ks[8], (D_MODEL, D_MODEL)), bo=rnd(ks[9], (1, D_MODEL)),
        unemb_w=rnd(ks[10], (D_MODEL, 1)), unemb_b=rnd(ks[11], (1, 1)),
        ff1_w=rnd(ks[12], (N, HIDDEN)), ff1_b=rnd(ks[13], (1, HIDDEN)),
    )

    x = jax.random.normal(ks[14], (B, N), dtype=jnp.float32)
    threshold = 0.1
    is_greater = True

    # Weight folding / slab packing is hoisted out of the per-call path (done once).
    slab = build_slab(params)
    jax.block_until_ready(slab)

    x_img, atten_w, x_atten = attention_forward(x, threshold, is_greater, slab)
    jax.block_until_ready((x_img, atten_w, x_atten))

    ref_img, ref_att, ref_xatt = _reference(x, threshold, is_greater, params)
    assert x_img.shape == (B, 1, 4, 4)
    assert atten_w.shape == (B, N_HEAD, N, N)
    assert x_atten.shape == (B, N)
    assert jnp.allclose(x_img, ref_img, atol=1e-4, rtol=1e-4)
    assert jnp.allclose(atten_w, ref_att, atol=1e-4, rtol=1e-4)
    assert jnp.allclose(x_atten, ref_xatt, atol=1e-4, rtol=1e-4)

    print("KERNEL_OK")
</pallas_src>

<mosaic_0001>
module attributes {stable_mosaic.version = 11 : i64} {
  func.func @_attn_kernel(%arg0: i32, %arg1: memref<16x1xf32, #tpu.memory_space<vmem>>, %arg2: memref<144x128xf32, #tpu.memory_space<vmem>>, %arg3: memref<24x128xf32, #tpu.memory_space<vmem>>) attributes {dimension_semantics = [#tpu.dimension_semantics<arbitrary>], iteration_bounds = array<i64: 1>, scalar_prefetch = 0 : i64, scratch_operands = 0 : i64, tpu.core_type = #tpu.core_type<tc>, window_params = [{pipeline_mode = #tpu.pipeline_mode<synchronous>, transform_indices = @transform_0, window_bounds = array<i64: 16, 1>}, {pipeline_mode = #tpu.pipeline_mode<synchronous>, transform_indices = @transform_1, window_bounds = array<i64: 144, 128>}, {pipeline_mode = #tpu.pipeline_mode<synchronous>, transform_indices = @transform_2, window_bounds = array<i64: 24, 128>}]} {
    %c0 = arith.constant 0 : index
    %c0_0 = arith.constant 0 : index
    %0 = vector.load %arg1[%c0, %c0_0] : memref<16x1xf32, #tpu.memory_space<vmem>>, vector<16x1xf32>
    %c0_1 = arith.constant 0 : index
    %c0_2 = arith.constant 0 : index
    %1 = vector.load %arg2[%c0_1, %c0_2] : memref<144x128xf32, #tpu.memory_space<vmem>>, vector<1x32xf32>
    %c0_3 = arith.constant 0 : index
    %c32 = arith.constant 32 : index
    %2 = vector.load %arg2[%c0_3, %c32] : memref<144x128xf32, #tpu.memory_space<vmem>>, vector<1x1xf32>
    %c8 = arith.constant 8 : index
    %c0_4 = arith.constant 0 : index
    %3 = vector.load %arg2[%c8, %c0_4] : memref<144x128xf32, #tpu.memory_space<vmem>>, vector<16x32xf32>
    %c24 = arith.constant 24 : index
    %c0_5 = arith.constant 0 : index
    %4 = vector.load %arg2[%c24, %c0_5] : memref<144x128xf32, #tpu.memory_space<vmem>>, vector<32x68xf32>
    %c56 = arith.constant 56 : index
    %c0_6 = arith.constant 0 : index
    %5 = vector.load %arg2[%c56, %c0_6] : memref<144x128xf32, #tpu.memory_space<vmem>>, vector<1x68xf32>
    %c64 = arith.constant 64 : index
    %c0_7 = arith.constant 0 : index
    %6 = vector.load %arg2[%c64, %c0_7] : memref<144x128xf32, #tpu.memory_space<vmem>>, vector<8x16xf32>
    %c72 = arith.constant 72 : index
    %c0_8 = arith.constant 0 : index
    %7 = vector.load %arg2[%c72, %c0_8] : memref<144x128xf32, #tpu.memory_space<vmem>>, vector<1x16xf32>
    %c80 = arith.constant 80 : index
    %c0_9 = arith.constant 0 : index
    %8 = vector.load %arg2[%c80, %c0_9] : memref<144x128xf32, #tpu.memory_space<vmem>>, vector<32x32xf32>
    %c112 = arith.constant 112 : index
    %c0_10 = arith.constant 0 : index
    %9 = vector.load %arg2[%c112, %c0_10] : memref<144x128xf32, #tpu.memory_space<vmem>>, vector<32x4xf32>
    %10 = vector.broadcast %0 : vector<16x1xf32> to vector<16x32xf32>
    %11 = vector.broadcast %1 : vector<1x32xf32> to vector<16x32xf32>
    %12 = arith.mulf %10, %11 : vector<16x32xf32>
    %13 = arith.addf %12, %3 : vector<16x32xf32>
    %cst = arith.constant dense<0.000000e+00> : vector<16x68xf32>
    %14 = tpu.matmul %13, %4, %cst {dimension_numbers = #tpu.dot_dimension_numbers<[1], [0], [0], [1], [0, 0, 1, 1], [], []>} : vector<16x32xf32>, vector<32x68xf32>, vector<16x68xf32> -> vector<16x68xf32>
    %15 = vector.broadcast %5 : vector<1x68xf32> to vector<16x68xf32>
    %16 = arith.addf %14, %15 : vector<16x68xf32>
    %17 = vector.extract_strided_slice %16 {offsets = [0, 0], sizes = [8, 68], strides = [1, 1]} : vector<16x68xf32> to vector<8x68xf32>
    %18 = vector.extract_strided_slice %17 {offsets = [0, 0], sizes = [8, 8], strides = [1, 1]} : vector<8x68xf32> to vector<8x8xf32>
    %19 = vector.extract_strided_slice %17 {offsets = [0, 32], sizes = [8, 8], strides = [1, 1]} : vector<8x68xf32> to vector<8x8xf32>
    %cst_11 = arith.constant dense<0.000000e+00> : vector<8x8xf32>
    %20 = tpu.matmul %18, %19, %cst_11 {dimension_numbers = #tpu.dot_dimension_numbers<[1], [1], [0], [0], [0, 0, 1, 0], [], []>} : vector<8x8xf32>, vector<8x8xf32>, vector<8x8xf32> -> vector<8x8xf32>
    %21 = vector.extract_strided_slice %17 {offsets = [0, 8], sizes = [8, 8], strides = [1, 1]} : vector<8x68xf32> to vector<8x8xf32>
    %22 = vector.extract_strided_slice %17 {offsets = [0, 40], sizes = [8, 8], strides = [1, 1]} : vector<8x68xf32> to vector<8x8xf32>
    %cst_12 = arith.constant dense<0.000000e+00> : vector<8x8xf32>
    %23 = tpu.matmul %21, %22, %cst_12 {dimension_numbers = #tpu.dot_dimension_numbers<[1], [1], [0], [0], [0, 0, 1, 0], [], []>} : vector<8x8xf32>, vector<8x8xf32>, vector<8x8xf32> -> vector<8x8xf32>
    %24 = vector.extract_strided_slice %17 {offsets = [0, 16], sizes = [8, 8], strides = [1, 1]} : vector<8x68xf32> to vector<8x8xf32>
    %25 = vector.extract_strided_slice %17 {offsets = [0, 48], sizes = [8, 8], strides = [1, 1]} : vector<8x68xf32> to vector<8x8xf32>
    %cst_13 = arith.constant dense<0.000000e+00> : vector<8x8xf32>
    %26 = tpu.matmul %24, %25, %cst_13 {dimension_numbers = #tpu.dot_dimension_numbers<[1], [1], [0], [0], [0, 0, 1, 0], [], []>} : vector<8x8xf32>, vector<8x8xf32>, vector<8x8xf32> -> vector<8x8xf32>
    %27 = vector.extract_strided_slice %17 {offsets = [0, 24], sizes = [8, 8], strides = [1, 1]} : vector<8x68xf32> to vector<8x8xf32>
    %28 = vector.extract_strided_slice %17 {offsets = [0, 56], sizes = [8, 8], strides = [1, 1]} : vector<8x68xf32> to vector<8x8xf32>
    %cst_14 = arith.constant dense<0.000000e+00> : vector<8x8xf32>
    %29 = tpu.matmul %27, %28, %cst_14 {dimension_numbers = #tpu.dot_dimension_numbers<[1], [1], [0], [0], [0, 0, 1, 0], [], []>} : vector<8x8xf32>, vector<8x8xf32>, vector<8x8xf32> -> vector<8x8xf32>
    %30 = tpu.concatenate %20, %23, %26, %29 in 1 : vector<8x8xf32>, vector<8x8xf32>, vector<8x8xf32>, vector<8x8xf32> -> vector<8x32xf32>
    %31 = vector.extract_strided_slice %16 {offsets = [8, 0], sizes = [8, 68], strides = [1, 1]} : vector<16x68xf32> to vector<8x68xf32>
    %32 = vector.extract_strided_slice %31 {offsets = [0, 0], sizes = [8, 8], strides = [1, 1]} : vector<8x68xf32> to vector<8x8xf32>
    %33 = vector.extract_strided_slice %31 {offsets = [0, 32], sizes = [8, 8], strides = [1, 1]} : vector<8x68xf32> to vector<8x8xf32>
    %cst_15 = arith.constant dense<0.000000e+00> : vector<8x8xf32>
    %34 = tpu.matmul %32, %33, %cst_15 {dimension_numbers = #tpu.dot_dimension_numbers<[1], [1], [0], [0], [0, 0, 1, 0], [], []>} : vector<8x8xf32>, vector<8x8xf32>, vector<8x8xf32> -> vector<8x8xf32>
    %35 = vector.extract_strided_slice %31 {offsets = [0, 8], sizes = [8, 8], strides = [1, 1]} : vector<8x68xf32> to vector<8x8xf32>
    %36 = vector.extract_strided_slice %31 {offsets = [0, 40], sizes = [8, 8], strides = [1, 1]} : vector<8x68xf32> to vector<8x8xf32>
    %cst_16 = arith.constant dense<0.000000e+00> : vector<8x8xf32>
    %37 = tpu.matmul %35, %36, %cst_16 {dimension_numbers = #tpu.dot_dimension_numbers<[1], [1], [0], [0], [0, 0, 1, 0], [], []>} : vector<8x8xf32>, vector<8x8xf32>, vector<8x8xf32> -> vector<8x8xf32>
    %38 = vector.extract_strided_slice %31 {offsets = [0, 16], sizes = [8, 8], strides = [1, 1]} : vector<8x68xf32> to vector<8x8xf32>
    %39 = vector.extract_strided_slice %31 {offsets = [0, 48], sizes = [8, 8], strides = [1, 1]} : vector<8x68xf32> to vector<8x8xf32>
    %cst_17 = arith.constant dense<0.000000e+00> : vector<8x8xf32>
    %40 = tpu.matmul %38, %39, %cst_17 {dimension_numbers = #tpu.dot_dimension_numbers<[1], [1], [0], [0], [0, 0, 1, 0], [], []>} : vector<8x8xf32>, vector<8x8xf32>, vector<8x8xf32> -> vector<8x8xf32>
    %41 = vector.extract_strided_slice %31 {offsets = [0, 24], sizes = [8, 8], strides = [1, 1]} : vector<8x68xf32> to vector<8x8xf32>
    %42 = vector.extract_strided_slice %31 {offsets = [0, 56], sizes = [8, 8], strides = [1, 1]} : vector<8x68xf32> to vector<8x8xf32>
    %cst_18 = arith.constant dense<0.000000e+00> : vector<8x8xf32>
    %43 = tpu.matmul %41, %42, %cst_18 {dimension_numbers = #tpu.dot_dimension_numbers<[1], [1], [0], [0], [0, 0, 1, 0], [], []>} : vector<8x8xf32>, vector<8x8xf32>, vector<8x8xf32> -> vector<8x8xf32>
    %44 = tpu.concatenate %34, %37, %40, %43 in 1 : vector<8x8xf32>, vector<8x8xf32>, vector<8x8xf32>, vector<8x8xf32> -> vector<8x32xf32>
    %45 = tpu.concatenate %30, %44 in 0 : vector<8x32xf32>, vector<8x32xf32> -> vector<16x32xf32>
    %cst_19 = arith.constant dense<0xFF800000> : vector<16xf32>
    %46 = vector.multi_reduction <maximumf>, %45, %cst_19 [1] : vector<16x32xf32> to vector<16xf32>
    %47 = vector.shape_cast %46 : vector<16xf32> to vector<16x1xf32>
    %48 = vector.broadcast %47 : vector<16x1xf32> to vector<16x32xf32>
    %49 = arith.subf %45, %48 : vector<16x32xf32>
    %50 = math.exp %49 : vector<16x32xf32>
    %cst_20 = arith.constant dense<0.000000e+00> : vector<16x32xf32>
    %51 = tpu.matmul %50, %8, %cst_20 {dimension_numbers = #tpu.dot_dimension_numbers<[1], [0], [0], [1], [0, 0, 1, 1], [], []>} : vector<16x32xf32>, vector<32x32xf32>, vector<16x32xf32> -> vector<16x32xf32>
    %52 = tpu.reciprocal %51 : vector<16x32xf32> -> vector<16x32xf32>
    %53 = arith.mulf %50, %52 : vector<16x32xf32>
    %cst_21 = arith.constant 1.000000e-01 : f32
    %54 = vector.broadcast %cst_21 : f32 to vector<16x32xf32>
    %55 = arith.cmpf ogt, %53, %54 : vector<16x32xf32>
    %cst_22 = arith.constant 0.000000e+00 : f32
    %56 = vector.broadcast %cst_22 : f32 to vector<16x32xf32>
    %57 = arith.select %55, %53, %56 : vector<16x32xi1>, vector<16x32xf32>
    %58 = vector.extract_strided_slice %16 {offsets = [0, 64], sizes = [8, 4], strides = [1, 1]} : vector<16x68xf32> to vector<8x4xf32>
    %59 = tpu.concatenate %58, %58, %58, %58 in 0 : vector<8x4xf32>, vector<8x4xf32>, vector<8x4xf32>, vector<8x4xf32> -> vector<32x4xf32>
    %60 = arith.mulf %59, %9 : vector<32x4xf32>
    %cst_23 = arith.constant dense<0.000000e+00> : vector<32xf32>
    %61 = vector.multi_reduction <add>, %60, %cst_23 [1] : vector<32x4xf32> to vector<32xf32>
    %62 = vector.shape_cast %61 : vector<32xf32> to vector<32x1xf32>
    %63 = vector.extract_strided_slice %16 {offsets = [8, 64], sizes = [8, 4], strides = [1, 1]} : vector<16x68xf32> to vector<8x4xf32>
    %64 = tpu.concatenate %63, %63, %63, %63 in 0 : vector<8x4xf32>, vector<8x4xf32>, vector<8x4xf32>, vector<8x4xf32> -> vector<32x4xf32>
    %65 = arith.mulf %64, %9 : vector<32x4xf32>
    %cst_24 = arith.constant dense<0.000000e+00> : vector<32xf32>
    %66 = vector.multi_reduction <add>, %65, %cst_24 [1] : vector<32x4xf32> to vector<32xf32>
    %67 = vector.shape_cast %66 : vector<32xf32> to vector<32x1xf32>
    %68 = tpu.concatenate %62, %67 in 1 : vector<32x1xf32>, vector<32x1xf32> -> vector<32x2xf32>
    %cst_25 = arith.constant dense<0.000000e+00> : vector<16x2xf32>
    %69 = tpu.matmul %57, %68, %cst_25 {dimension_numbers = #tpu.dot_dimension_numbers<[1], [0], [0], [1], [0, 0, 1, 1], [], []>} : vector<16x32xf32>, vector<32x2xf32>, vector<16x2xf32> -> vector<16x2xf32>
    %70 = vector.extract_strided_slice %69 {offsets = [0, 0], sizes = [8, 1], strides = [1, 1]} : vector<16x2xf32> to vector<8x1xf32>
    %71 = tpu.transpose %70, [1, 0] : vector<8x1xf32> -> vector<1x8xf32>
    %72 = vector.extract_strided_slice %69 {offsets = [8, 1], sizes = [8, 1], strides = [1, 1]} : vector<16x2xf32> to vector<8x1xf32>
    %73 = tpu.transpose %72, [1, 0] : vector<8x1xf32> -> vector<1x8xf32>
    %74 = tpu.concatenate %71, %73 in 0 : vector<1x8xf32>, vector<1x8xf32> -> vector<2x8xf32>
    %75 = vector.broadcast %2 : vector<1x1xf32> to vector<2x8xf32>
    %76 = arith.addf %74, %75 : vector<2x8xf32>
    %cst_26 = arith.constant dense<0.000000e+00> : vector<2x16xf32>
    %77 = tpu.matmul %76, %6, %cst_26 {dimension_numbers = #tpu.dot_dimension_numbers<[1], [0], [0], [1], [0, 0, 1, 1], [], []>} : vector<2x8xf32>, vector<8x16xf32>, vector<2x16xf32> -> vector<2x16xf32>
    %78 = vector.broadcast %7 : vector<1x16xf32> to vector<2x16xf32>
    %79 = arith.addf %77, %78 : vector<2x16xf32>
    %cst_27 = arith.constant 0.000000e+00 : f32
    %80 = vector.broadcast %cst_27 : f32 to vector<16x96xf32>
    %81 = tpu.concatenate %57, %80 in 1 : vector<16x32xf32>, vector<16x96xf32> -> vector<16x128xf32>
    %c0_28 = arith.constant 0 : index
    %c0_29 = arith.constant 0 : index
    %82 = vector.load %arg3[%c0_28, %c0_29] : memref<24x128xf32, #tpu.memory_space<vmem>>, vector<16x128xf32>
    tpu.vector_store %arg3[%c0_28, %c0_29], %81 {strides = array<i32>} : memref<24x128xf32, #tpu.memory_space<vmem>>, vector<16x128xf32>,
    %cst_30 = arith.constant 0.000000e+00 : f32
    %83 = vector.broadcast %cst_30 : f32 to vector<2x104xf32>
    %84 = tpu.concatenate %79, %76, %83 in 1 : vector<2x16xf32>, vector<2x8xf32>, vector<2x104xf32> -> vector<2x128xf32>
    %cst_31 = arith.constant 0.000000e+00 : f32
    %85 = vector.broadcast %cst_31 : f32 to vector<6x128xf32>
    %86 = tpu.concatenate %84, %85 in 0 : vector<2x128xf32>, vector<6x128xf32> -> vector<8x128xf32>
    %c16 = arith.constant 16 : index
    %c0_32 = arith.constant 0 : index
    %87 = vector.load %arg3[%c16, %c0_32] : memref<24x128xf32, #tpu.memory_space<vmem>>, vector<8x128xf32>
    tpu.vector_store %arg3[%c16, %c0_32], %86 {strides = array<i32>} : memref<24x128xf32, #tpu.memory_space<vmem>>, vector<8x128xf32>,
    return
  }
  func.func @transform_0(%arg0: i32) -> (i32, i32) {
    %c0_i32 = arith.constant 0 : i32
    %c0_i32_0 = arith.constant 0 : i32
    %c0_i32_1 = arith.constant 0 : i32
    return %c0_i32, %c0_i32_0 : i32, i32
  }
  func.func @transform_1(%arg0: i32) -> (i32, i32) {
    %c0_i32 = arith.constant 0 : i32
    %c0_i32_0 = arith.constant 0 : i32
    %c0_i32_1 = arith.constant 0 : i32
    return %c0_i32, %c0_i32_0 : i32, i32
  }
  func.func @transform_2(%arg0: i32) -> (i32, i32) {
    %c0_i32 = arith.constant 0 : i32
    %c0_i32_0 = arith.constant 0 : i32
    %c0_i32_1 = arith.constant 0 : i32
    return %c0_i32, %c0_i32_0 : i32, i32
  }
}

</mosaic_0001>

<llo_original>
// kernel: tpu_custom_call.1
$region0: #{tpu_custom_call.1}
  #allocation0 [shape = 'u32[]', space=smem, size = 0x4, offset = 0x4, fixed_abs, tag = 'smem constant byte address 0x4 - core index']
  #allocation1 [shape = 'u32[72,128]{1,0:T(1,128)}', space=vmem, size = 0x9000, scoped, tag = 'internal scratch']
  %s0 = inlined_call_operand.vmem [shape: f32[16,1], index: 0, kind: input, shape index: {}]
  %s1 = inlined_call_operand.hbm [shape: f32[144,128], index: 1, kind: input, shape index: {}]
  %s2 = inlined_call_operand.hbm [shape: f32[24,128], index: 2, kind: output, shape index: {}]
  %s3 = sld [smem:[#allocation0]]
  $region22: #{tpu_custom_call.1} parent=0
    _
  %s5 = ssub.s32 1, %s3
  %s6 = scalar_select 0, %s5, %s3
  $region1: #{tpu_custom_call.1} parent=0
    #allocation2 [shape = 'u8[73728]{0}', space=vmem, size = 0x12000, scoped, tag = 'input window, operand 1, single buffered']
    #allocation3 [shape = 's32[1]{0}', space=sflag, size = 0x4, scoped, tag = 'scoped memory for tpu_custom_call.1']
    #allocation4 [shape = 's32[1]{0}', space=sflag, size = 0x4, scoped, tag = 'scoped memory for tpu_custom_call.1']
    #allocation5 [shape = 'u8[12288]{0}', space=vmem, size = 0x3000, scoped, tag = 'output window, operand 0, single buffered']
    %7 = vsyncpa [#allocation3], 0
    %8 = vsyncpa [#allocation4], 0
    // Predicated region
    $region2: #{tpu_custom_call.1} parent=1 // pred_check
      _
    $region3: #{tpu_custom_call.1} parent=1 // pred_check_branch
      %10 = sbr.rel (0) target = $region5
    $region4: #{tpu_custom_call.1} parent=1 // pred_region
      _
    $region5: #{tpu_custom_call.1} parent=1 // pred_fallthru
      _
    // Predicated region
    $region6: #{tpu_custom_call.1} parent=1 // pred_check
      _
    $region7: #{tpu_custom_call.1} parent=1 // pred_check_branch
      %12 = sbr.rel (0) target = $region9
    $region8: #{tpu_custom_call.1} parent=1 // pred_region
      %14 = vsyncadd [#allocation3], 0
      %s15 = sshll.u32 %s1, 4
      %s16 = int_to_ptr.hbm [resolvable:$true] %s15
      %s17 = sshll.u32 [#allocation2], 4
      %s18 = int_to_ptr.vmem [resolvable:$true] %s17
      %23 = dma.hbm_to_vmem [thread:$0]  %s16, 2304, %s18, [#allocation3], 128, 128, 8
    $region9: #{tpu_custom_call.1} parent=1 // pred_fallthru
      _
    // Predicated region
    $region10: #{tpu_custom_call.1} parent=1 // pred_check
      _
    $region11: #{tpu_custom_call.1} parent=1 // pred_check_branch
      %25 = sbr.rel (0) target = $region13
    $region12: #{tpu_custom_call.1} parent=1 // pred_region
      %27 = dma.done [#allocation3], 2304
    $region13: #{tpu_custom_call.1} parent=1 // pred_fallthru
      _
    %v28 = vld [vmem:[%s0] sm:$0xff]
    %v29 = vld [vmem:[%s0 + $0x8] sm:$0xff]
    %v30 = vld [vmem:[#allocation2] sm:$0x1]
    %v31 = vld [vmem:[#allocation2 + $0x8] sm:$0xff]
    %v32 = vld [vmem:[#allocation2 + $0x10] sm:$0xff]
    %v33 = vld [vmem:[#allocation2 + $0x18] sm:$0xff]
    %v34 = vld [vmem:[#allocation2 + $0x20] sm:$0xff]
    %v35 = vld [vmem:[#allocation2 + $0x28] sm:$0xff]
    %v36 = vld [vmem:[#allocation2 + $0x30] sm:$0xff]
    %v37 = vld [vmem:[#allocation2 + $0x38] sm:$0x1]
    %v38 = vld [vmem:[#allocation2 + $0x40] sm:$0xff]
    %v39 = vld [vmem:[#allocation2 + $0x48] sm:$0x1]
    %v40 = vld [vmem:[#allocation2 + $0x50] sm:$0xff]
    %v41 = vld [vmem:[#allocation2 + $0x58] sm:$0xff]
    %v42 = vld [vmem:[#allocation2 + $0x60] sm:$0xff]
    %v43 = vld [vmem:[#allocation2 + $0x68] sm:$0xff]
    %v44 = vld [vmem:[#allocation2 + $0x70] sm:$0xff]
    %v45 = vld [vmem:[#allocation2 + $0x78] sm:$0xff]
    %v46 = vld [vmem:[#allocation2 + $0x80] sm:$0xff]
    %v47 = vld [vmem:[#allocation2 + $0x88] sm:$0xff]
    %49 = vset.pattern.permute.xlu0 0
    %50 = vperm.xlu0 %49, %v28
    %v51 = vpop.permute.xlu0 %50
    %54 = vset.pattern.permute.xlu0 0
    %55 = vperm.xlu0 %54, %v29
    %v56 = vpop.permute.xlu0 %55
    %v58 = vperm.slane %v30, 0
    %v59 = vmul.f32 %v51, %v58
    %v60 = vmul.f32 %v56, %v58
    %v61 = vadd.f32 %v59, %v31
    %v62 = vadd.f32 %v60, %v32
    %v63 = vperm.slane %v37, 0
    %vm64 = vcmask 261120
    %v66 = vsel %vm64, %v61, 0
    %v69 = vsel %vm64, %v62, 0
    %71 = vmatpush.msra.mxu0 0.0
    %72 = vmatpush.msra.mxu0 0.0
    %73 = vmatpush.msra.mxu0 0.0
    %74 = vmatpush.msra.mxu0 0.0
    %75 = vmatpush.msra.mxu0 0.0
    %76 = vmatpush.msra.mxu0 0.0
    %77 = vmatpush.msra.mxu0 0.0
    %78 = vmatpush.msra.mxu0 0.0
    %79 = vmatpush.msra.mxu0 0.0
    %80 = vmatpush.msra.mxu0 0.0
    %81 = vmatpush.msra.mxu0 0.0
    %82 = vmatpush.msra.mxu0 0.0
    %83 = vmatpush.msra.mxu0 %v36
    %84 = vmatpush.msra.mxu0 %v35
    %85 = vmatpush.msra.mxu0 %v34
    %86 = vmatpush.msra.mxu0 %v33
    %87 = vmatmul.f32.gmra.mxu0 %v66
    %v88 = vpop.f32.mrf.mxu0
    %v89 = vadd.f32 %v63, %v88
    %90 = vmatmul.f32.gmra.mxu0 %v69
    %v91 = vpop.f32.mrf.mxu0
    %v92 = vadd.f32 %v63, %v91
    %93 = vdwg.mxu0
    %95 = vrot.lane.b32.xlu0 %v89, 96
    %v96 = vpop.permute.xlu0 %95
    %vm97 = vcmask 64512
    %v98 = vsel %vm97, %v89, 0
    %v100 = vsel %vm97, %v96, 0
    %102 = vmatpush.xpose.msra.mxu0 0.0
    %103 = vmatpush.xpose.msra.mxu0 0.0
    %104 = vmatpush.xpose.msra.mxu0 0.0
    %105 = vmatpush.xpose.msra.mxu0 0.0
    %106 = vmatpush.xpose.msra.mxu0 0.0
    %107 = vmatpush.xpose.msra.mxu0 0.0
    %108 = vmatpush.xpose.msra.mxu0 0.0
    %109 = vmatpush.xpose.msra.mxu0 0.0
    %110 = vmatpush.xpose.msra.mxu0 0.0
    %111 = vmatpush.xpose.msra.mxu0 0.0
    %112 = vmatpush.xpose.msra.mxu0 0.0
    %113 = vmatpush.xpose.msra.mxu0 0.0
    %114 = vmatpush.xpose.msra.mxu0 0.0
    %115 = vmatpush.xpose.msra.mxu0 0.0
    %116 = vmatpush.xpose.msra.mxu0 0.0
    %117 = vmatpush.xpose.msra.mxu0 %v100
    %118 = vmatmul.f32.gmra.mxu0 %v98
    %v119 = vpop.f32.mrf.mxu0
    %v120 = vadd.f32 0.0, %v119
    %121 = vdwg.mxu0
    %122 = vrot.lane.b32.xlu0 %v89, 120
    %v123 = vpop.permute.xlu0 %122
    %124 = vrot.lane.b32.xlu0 %v89, 88
    %v125 = vpop.permute.xlu0 %124
    %v126 = vsel %vm97, %v123, 0
    %v128 = vsel %vm97, %v125, 0
    %130 = vmatpush.xpose.msra.mxu0 0.0
    %131 = vmatpush.xpose.msra.mxu0 0.0
    %132 = vmatpush.xpose.msra.mxu0 0.0
    %133 = vmatpush.xpose.msra.mxu0 0.0
    %134 = vmatpush.xpose.msra.mxu0 0.0
    %135 = vmatpush.xpose.msra.mxu0 0.0
    %136 = vmatpush.xpose.msra.mxu0 0.0
    %137 = vmatpush.xpose.msra.mxu0 0.0
    %138 = vmatpush.xpose.msra.mxu0 0.0
    %139 = vmatpush.xpose.msra.mxu0 0.0
    %140 = vmatpush.xpose.msra.mxu0 0.0
    %141 = vmatpush.xpose.msra.mxu0 0.0
    %142 = vmatpush.xpose.msra.mxu0 0.0
    %143 = vmatpush.xpose.msra.mxu0 0.0
    %144 = vmatpush.xpose.msra.mxu0 0.0
    %145 = vmatpush.xpose.msra.mxu0 %v128
    %146 = vmatmul.f32.gmra.mxu0 %v126
    %v147 = vpop.f32.mrf.mxu0
    %v148 = vadd.f32 0.0, %v147
    %149 = vdwg.mxu0
    %150 = vrot.lane.b32.xlu0 %v89, 112
    %v151 = vpop.permute.xlu0 %150
    %152 = vrot.lane.b32.xlu0 %v89, 80
    %v153 = vpop.permute.xlu0 %152
    %v154 = vsel %vm97, %v151, 0
    %v156 = vsel %vm97, %v153, 0
    %158 = vmatpush.xpose.msra.mxu0 0.0
    %159 = vmatpush.xpose.msra.mxu0 0.0
    %160 = vmatpush.xpose.msra.mxu0 0.0
    %161 = vmatpush.xpose.msra.mxu0 0.0
    %162 = vmatpush.xpose.msra.mxu0 0.0
    %163 = vmatpush.xpose.msra.mxu0 0.0
    %164 = vmatpush.xpose.msra.mxu0 0.0
    %165 = vmatpush.xpose.msra.mxu0 0.0
    %166 = vmatpush.xpose.msra.mxu0 0.0
    %167 = vmatpush.xpose.msra.mxu0 0.0
    %168 = vmatpush.xpose.msra.mxu0 0.0
    %169 = vmatpush.xpose.msra.mxu0 0.0
    %170 = vmatpush.xpose.msra.mxu0 0.0
    %171 = vmatpush.xpose.msra.mxu0 0.0
    %172 = vmatpush.xpose.msra.mxu0 0.0
    %173 = vmatpush.xpose.msra.mxu0 %v156
    %174 = vmatmul.f32.gmra.mxu0 %v154
    %v175 = vpop.f32.mrf.mxu0
    %v176 = vadd.f32 0.0, %v175
    %177 = vdwg.mxu0
    %178 = vrot.lane.b32.xlu0 %v89, 104
    %v179 = vpop.permute.xlu0 %178
    %180 = vrot.lane.b32.xlu0 %v89, 72
    %v181 = vpop.permute.xlu0 %180
    %v182 = vsel %vm97, %v179, 0
    %v184 = vsel %vm97, %v181, 0
    %186 = vmatpush.xpose.msra.mxu0 0.0
    %187 = vmatpush.xpose.msra.mxu0 0.0
    %188 = vmatpush.xpose.msra.mxu0 0.0
    %189 = vmatpush.xpose.msra.mxu0 0.0
    %190 = vmatpush.xpose.msra.mxu0 0.0
    %191 = vmatpush.xpose.msra.mxu0 0.0
    %192 = vmatpush.xpose.msra.mxu0 0.0
    %193 = vmatpush.xpose.msra.mxu0 0.0
    %194 = vmatpush.xpose.msra.mxu0 0.0
    %195 = vmatpush.xpose.msra.mxu0 0.0
    %196 = vmatpush.xpose.msra.mxu0 0.0
    %197 = vmatpush.xpose.msra.mxu0 0.0
    %198 = vmatpush.xpose.msra.mxu0 0.0
    %199 = vmatpush.xpose.msra.mxu0 0.0
    %200 = vmatpush.xpose.msra.mxu0 0.0
    %201 = vmatpush.xpose.msra.mxu0 %v184
    %202 = vmatmul.f32.gmra.mxu0 %v182
    %v203 = vpop.f32.mrf.mxu0
    %v204 = vadd.f32 0.0, %v203
    %205 = vdwg.mxu0
    %207 = vrot.lane.b32.xlu0 %v148, 8
    %v208 = vpop.permute.xlu0 %207
    %211 = vrot.lane.b32.xlu0 %v176, 16
    %v212 = vpop.permute.xlu0 %211
    %215 = vrot.lane.b32.xlu0 %v204, 24
    %v216 = vpop.permute.xlu0 %215
    %v218 = vsel %vm97, %v120, %v208
    %vm219 = vcmask 130048
    %v220 = vsel %vm219, %v218, %v212
    %vm221 = vcmask 195584
    %v222 = vsel %vm221, %v220, %v216
    %224 = vrot.lane.b32.xlu0 %v92, 96
    %v225 = vpop.permute.xlu0 %224
    %v226 = vsel %vm97, %v92, 0
    %v228 = vsel %vm97, %v225, 0
    %230 = vmatpush.xpose.msra.mxu0 0.0
    %231 = vmatpush.xpose.msra.mxu0 0.0
    %232 = vmatpush.xpose.msra.mxu0 0.0
    %233 = vmatpush.xpose.msra.mxu0 0.0
    %234 = vmatpush.xpose.msra.mxu0 0.0
    %235 = vmatpush.xpose.msra.mxu0 0.0
    %236 = vmatpush.xpose.msra.mxu0 0.0
    %237 = vmatpush.xpose.msra.mxu0 0.0
    %238 = vmatpush.xpose.msra.mxu0 0.0
    %239 = vmatpush.xpose.msra.mxu0 0.0
    %240 = vmatpush.xpose.msra.mxu0 0.0
    %241 = vmatpush.xpose.msra.mxu0 0.0
    %242 = vmatpush.xpose.msra.mxu0 0.0
    %243 = vmatpush.xpose.msra.mxu0 0.0
    %244 = vmatpush.xpose.msra.mxu0 0.0
    %245 = vmatpush.xpose.msra.mxu0 %v228
    %246 = vmatmul.f32.gmra.mxu0 %v226
    %v247 = vpop.f32.mrf.mxu0
    %v248 = vadd.f32 0.0, %v247
    %249 = vdwg.mxu0
    %250 = vrot.lane.b32.xlu0 %v92, 120
    %v251 = vpop.permute.xlu0 %250
    %252 = vrot.lane.b32.xlu0 %v92, 88
    %v253 = vpop.permute.xlu0 %252
    %v254 = vsel %vm97, %v251, 0
    %v256 = vsel %vm97, %v253, 0
    %258 = vmatpush.xpose.msra.mxu0 0.0
    %259 = vmatpush.xpose.msra.mxu0 0.0
    %260 = vmatpush.xpose.msra.mxu0 0.0
    %261 = vmatpush.xpose.msra.mxu0 0.0
    %262 = vmatpush.xpose.msra.mxu0 0.0
    %263 = vmatpush.xpose.msra.mxu0 0.0
    %264 = vmatpush.xpose.msra.mxu0 0.0
    %265 = vmatpush.xpose.msra.mxu0 0.0
    %266 = vmatpush.xpose.msra.mxu0 0.0
    %267 = vmatpush.xpose.msra.mxu0 0.0
    %268 = vmatpush.xpose.msra.mxu0 0.0
    %269 = vmatpush.xpose.msra.mxu0 0.0
    %270 = vmatpush.xpose.msra.mxu0 0.0
    %271 = vmatpush.xpose.msra.mxu0 0.0
    %272 = vmatpush.xpose.msra.mxu0 0.0
    %273 = vmatpush.xpose.msra.mxu0 %v256
    %274 = vmatmul.f32.gmra.mxu0 %v254
    %v275 = vpop.f32.mrf.mxu0
    %v276 = vadd.f32 0.0, %v275
    %277 = vdwg.mxu0
    %278 = vrot.lane.b32.xlu0 %v92, 112
    %v279 = vpop.permute.xlu0 %278
    %280 = vrot.lane.b32.xlu0 %v92, 80
    %v281 = vpop.permute.xlu0 %280
    %v282 = vsel %vm97, %v279, 0
    %v284 = vsel %vm97, %v281, 0
    %286 = vmatpush.xpose.msra.mxu0 0.0
    %287 = vmatpush.xpose.msra.mxu0 0.0
    %288 = vmatpush.xpose.msra.mxu0 0.0
    %289 = vmatpush.xpose.msra.mxu0 0.0
    %290 = vmatpush.xpose.msra.mxu0 0.0
    %291 = vmatpush.xpose.msra.mxu0 0.0
    %292 = vmatpush.xpose.msra.mxu0 0.0
    %293 = vmatpush.xpose.msra.mxu0 0.0
    %294 = vmatpush.xpose.msra.mxu0 0.0
    %295 = vmatpush.xpose.msra.mxu0 0.0
    %296 = vmatpush.xpose.msra.mxu0 0.0
    %297 = vmatpush.xpose.msra.mxu0 0.0
    %298 = vmatpush.xpose.msra.mxu0 0.0
    %299 = vmatpush.xpose.msra.mxu0 0.0
    %300 = vmatpush.xpose.msra.mxu0 0.0
    %301 = vmatpush.xpose.msra.mxu0 %v284
    %302 = vmatmul.f32.gmra.mxu0 %v282
    %v303 = vpop.f32.mrf.mxu0
    %v304 = vadd.f32 0.0, %v303
    %305 = vdwg.mxu0
    %306 = vrot.lane.b32.xlu0 %v92, 104
    %v307 = vpop.permute.xlu0 %306
    %308 = vrot.lane.b32.xlu0 %v92, 72
    %v309 = vpop.permute.xlu0 %308
    %v310 = vsel %vm97, %v307, 0
    %v312 = vsel %vm97, %v309, 0
    %314 = vmatpush.xpose.msra.mxu0 0.0
    %315 = vmatpush.xpose.msra.mxu0 0.0
    %316 = vmatpush.xpose.msra.mxu0 0.0
    %317 = vmatpush.xpose.msra.mxu0 0.0
    %318 = vmatpush.xpose.msra.mxu0 0.0
    %319 = vmatpush.xpose.msra.mxu0 0.0
    %320 = vmatpush.xpose.msra.mxu0 0.0
    %321 = vmatpush.xpose.msra.mxu0 0.0
    %322 = vmatpush.xpose.msra.mxu0 0.0
    %323 = vmatpush.xpose.msra.mxu0 0.0
    %324 = vmatpush.xpose.msra.mxu0 0.0
    %325 = vmatpush.xpose.msra.mxu0 0.0
    %326 = vmatpush.xpose.msra.mxu0 0.0
    %327 = vmatpush.xpose.msra.mxu0 0.0
    %328 = vmatpush.xpose.msra.mxu0 0.0
    %329 = vmatpush.xpose.msra.mxu0 %v312
    %330 = vmatmul.f32.gmra.mxu0 %v310
    %v331 = vpop.f32.mrf.mxu0
    %v332 = vadd.f32 0.0, %v331
    %333 = vdwg.mxu0
    %335 = vrot.lane.b32.xlu0 %v276, 8
    %v336 = vpop.permute.xlu0 %335
    %339 = vrot.lane.b32.xlu0 %v304, 16
    %v340 = vpop.permute.xlu0 %339
    %343 = vrot.lane.b32.xlu0 %v332, 24
    %v344 = vpop.permute.xlu0 %343
    %v346 = vsel %vm97, %v248, %v336
    %v347 = vsel %vm219, %v346, %v340
    %v348 = vsel %vm221, %v347, %v344
    %v349 = vsel %vm64, %v222, -inf
    %350 = vmax.xlane.f32.xlu0 %v349
    %v351 = vpop.xlane.xlu0 %350
    %v352 = vsel %vm64, %v348, -inf
    %353 = vmax.xlane.f32.xlu0 %v352
    %v354 = vpop.xlane.xlu0 %353
    %v355 = vsub.f32 %v222, %v351
    %v356 = vsub.f32 %v348, %v354
    %v357 = vmul.f32 %v355, 1.442695
    %v358 = vpow.pop %v357
    %v359 = vmul.f32 %v356, 1.442695
    %v360 = vpow.pop %v359
    %v362 = vsel %vm64, %v358, 0
    %v365 = vsel %vm64, %v360, 0
    %367 = vmatpush.msra.mxu0 0.0
    %368 = vmatpush.msra.mxu0 0.0
    %369 = vmatpush.msra.mxu0 0.0
    %370 = vmatpush.msra.mxu0 0.0
    %371 = vmatpush.msra.mxu0 0.0
    %372 = vmatpush.msra.mxu0 0.0
    %373 = vmatpush.msra.mxu0 0.0
    %374 = vmatpush.msra.mxu0 0.0
    %375 = vmatpush.msra.mxu0 0.0
    %376 = vmatpush.msra.mxu0 0.0
    %377 = vmatpush.msra.mxu0 0.0
    %378 = vmatpush.msra.mxu0 0.0
    %379 = vmatpush.msra.mxu0 %v43
    %380 = vmatpush.msra.mxu0 %v42
    %381 = vmatpush.msra.mxu0 %v41
    %382 = vmatpush.msra.mxu0 %v40
    %383 = vmatmul.f32.gmra.mxu0 %v362
    %v384 = vpop.f32.mrf.mxu0
    %v385 = vadd.f32 0.0, %v384
    %386 = vmatmul.f32.gmra.mxu0 %v365
    %v387 = vpop.f32.mrf.mxu0
    %v388 = vadd.f32 0.0, %v387
    %389 = vdwg.mxu0
    %v390 = vrcp.pop %v385
    %v391 = vmul.f32 %v385, %v390
    %v392 = vsub.f32 1.0, %v391
    %v393 = vmul.f32 %v390, %v392
    %v394 = vadd.f32 %v390, %v393
    %vm395 = vweird.f32 %v385
    %vm396 = vweird.f32 %v390
    %vm397 = vmor %vm395, %vm396
    %v398 = vsel %vm397, %v390, %v394
    %v399 = vand.u32 2147483647, %v385
    %vm400 = vcmp.eq.f32.partialorder %v399, 8.507059e+37
    %v401 = vand.u32 %v385, 2147483648
    %v402 = vor.u32 1.1754944e-38, %v401
    %v403 = vsel %vm400, %v402, %v398
    %v404 = vrcp.pop %v388
    %v405 = vmul.f32 %v388, %v404
    %v406 = vsub.f32 1.0, %v405
    %v407 = vmul.f32 %v404, %v406
    %v408 = vadd.f32 %v404, %v407
    %vm409 = vweird.f32 %v388
    %vm410 = vweird.f32 %v404
    %vm411 = vmor %vm409, %vm410
    %v412 = vsel %vm411, %v404, %v408
    %v413 = vand.u32 2147483647, %v388
    %vm414 = vcmp.eq.f32.partialorder %v413, 8.507059e+37
    %v415 = vand.u32 %v388, 2147483648
    %v416 = vor.u32 1.1754944e-38, %v415
    %v417 = vsel %vm414, %v416, %v412
    %v418 = vmul.f32 %v358, %v403
    %v419 = vmul.f32 %v360, %v417
    %vm420 = vcmp.gt.f32.partialorder %v418, 0.1
    %vm421 = vcmp.gt.f32.partialorder %v419, 0.1
    %v422 = vsel %vm420, %v418, 0.0
    %v423 = vsel %vm421, %v419, 0.0
    %428 = vrot.lane.b32.xlu0 %v44, 64
    %v429 = vpop.permute.xlu0 %428
    %430 = vrot.lane.b32.xlu0 %v45, 64
    %v431 = vpop.permute.xlu0 %430
    %432 = vrot.lane.b32.xlu0 %v46, 64
    %v433 = vpop.permute.xlu0 %432
    %434 = vrot.lane.b32.xlu0 %v47, 64
    %v435 = vpop.permute.xlu0 %434
    %v440 = vmul.f32 %v89, %v429
    %v441 = vmul.f32 %v89, %v431
    %v442 = vmul.f32 %v89, %v433
    %v443 = vmul.f32 %v89, %v435
    %448 = vrot.lane.b32.xlu0 %v440, 64
    %v449 = vpop.permute.xlu0 %448
    %450 = vrot.lane.b32.xlu0 %v441, 64
    %v451 = vpop.permute.xlu0 %450
    %452 = vrot.lane.b32.xlu0 %v442, 64
    %v453 = vpop.permute.xlu0 %452
    %454 = vrot.lane.b32.xlu0 %v443, 64
    %v455 = vpop.permute.xlu0 %454
    %vm460 = vcmask 31744
    %v461 = vsel %vm460, %v449, 0.0
    %462 = vadd.xlane.f32.xlu0 %v461
    %v463 = vpop.xlane.xlu0 %462
    %v464 = vsel %vm460, %v451, 0.0
    %465 = vadd.xlane.f32.xlu0 %v464
    %v466 = vpop.xlane.xlu0 %465
    %v467 = vsel %vm460, %v453, 0.0
    %468 = vadd.xlane.f32.xlu0 %v467
    %v469 = vpop.xlane.xlu0 %468
    %v470 = vsel %vm460, %v455, 0.0
    %471 = vadd.xlane.f32.xlu0 %v470
    %v472 = vpop.xlane.xlu0 %471
    %v473 = vmul.f32 %v92, %v429
    %v474 = vmul.f32 %v92, %v431
    %v475 = vmul.f32 %v92, %v433
    %v476 = vmul.f32 %v92, %v435
    %481 = vrot.lane.b32.xlu0 %v473, 64
    %v482 = vpop.permute.xlu0 %481
    %483 = vrot.lane.b32.xlu0 %v474, 64
    %v484 = vpop.permute.xlu0 %483
    %485 = vrot.lane.b32.xlu0 %v475, 64
    %v486 = vpop.permute.xlu0 %485
    %487 = vrot.lane.b32.xlu0 %v476, 64
    %v488 = vpop.permute.xlu0 %487
    %v493 = vsel %vm460, %v482, 0.0
    %494 = vadd.xlane.f32.xlu0 %v493
    %v495 = vpop.xlane.xlu0 %494
    %v496 = vsel %vm460, %v484, 0.0
    %497 = vadd.xlane.f32.xlu0 %v496
    %v498 = vpop.xlane.xlu0 %497
    %v499 = vsel %vm460, %v486, 0.0
    %500 = vadd.xlane.f32.xlu0 %v499
    %v501 = vpop.xlane.xlu0 %500
    %v502 = vsel %vm460, %v488, 0.0
    %503 = vadd.xlane.f32.xlu0 %v502
    %v504 = vpop.xlane.xlu0 %503
    %vm505 = vcmask 7168
    %v506 = vsel %vm505, %v463, %v495
    %v507 = vsel %vm505, %v466, %v498
    %v508 = vsel %vm505, %v469, %v501
    %v509 = vsel %vm505, %v472, %v504
    %v511 = vsel %vm64, %v422, 0
    %v514 = vsel %vm64, %v423, 0
    %516 = vmatpush.msra.mxu0 0.0
    %517 = vmatpush.msra.mxu0 0.0
    %518 = vmatpush.msra.mxu0 0.0
    %519 = vmatpush.msra.mxu0 0.0
    %520 = vmatpush.msra.mxu0 0.0
    %521 = vmatpush.msra.mxu0 0.0
    %522 = vmatpush.msra.mxu0 0.0
    %523 = vmatpush.msra.mxu0 0.0
    %524 = vmatpush.msra.mxu0 0.0
    %525 = vmatpush.msra.mxu0 0.0
    %526 = vmatpush.msra.mxu0 0.0
    %527 = vmatpush.msra.mxu0 0.0
    %528 = vmatpush.msra.mxu0 %v509
    %529 = vmatpush.msra.mxu0 %v508
    %530 = vmatpush.msra.mxu0 %v507
    %531 = vmatpush.msra.mxu0 %v506
    %532 = vmatmul.f32.gmra.mxu0 %v511
    %v533 = vpop.f32.mrf.mxu0
    %v534 = vadd.f32 0.0, %v533
    %535 = vmatmul.f32.gmra.mxu0 %v514
    %v536 = vpop.f32.mrf.mxu0
    %v537 = vadd.f32 0.0, %v536
    %538 = vdwg.mxu0
    %539 = vxpose.xlu0.b32.start [1/16] %v534, 128
    %540 = vxpose.xlu0.b32.cont [2/16] 0.0, 128
    %541 = vxpose.xlu0.b32.cont [3/16] 0.0, 128
    %542 = vxpose.xlu0.b32.cont [4/16] 0.0, 128
    %543 = vxpose.xlu0.b32.cont [5/16] 0.0, 128
    %544 = vxpose.xlu0.b32.cont [6/16] 0.0, 128
    %545 = vxpose.xlu0.b32.cont [7/16] 0.0, 128
    %546 = vxpose.xlu0.b32.cont [8/16] 0.0, 128
    %547 = vxpose.xlu0.b32.cont [9/16] 0.0, 128
    %548 = vxpose.xlu0.b32.cont [10/16] 0.0, 128
    %549 = vxpose.xlu0.b32.cont [11/16] 0.0, 128
    %550 = vxpose.xlu0.b32.cont [12/16] 0.0, 128
    %551 = vxpose.xlu0.b32.cont [13/16] 0.0, 128
    %552 = vxpose.xlu0.b32.cont [14/16] 0.0, 128
    %553 = vxpose.xlu0.b32.cont [15/16] 0.0, 128
    %554 = vxpose.xlu0.b32.end [16/16] 0.0, 128
    %v555 = vpop.trf.xlu0
    %v556 = vpop.trf.xlu0
    %v557 = vpop.trf.xlu0
    %v558 = vpop.trf.xlu0
    %v559 = vpop.trf.xlu0
    %v560 = vpop.trf.xlu0
    %v561 = vpop.trf.xlu0
    %v562 = vpop.trf.xlu0
    %v563 = vpop.trf.xlu0
    %v564 = vpop.trf.xlu0
    %v565 = vpop.trf.xlu0
    %v566 = vpop.trf.xlu0
    %v567 = vpop.trf.xlu0
    %v568 = vpop.trf.xlu0
    %v569 = vpop.trf.xlu0
    %v570 = vpop.trf.xlu0
    %572 = vrot.lane.b32.xlu0 %v537, 127
    %v573 = vpop.permute.xlu0 %572
    %575 = vxpose.xlu0.b32.start [1/16] %v573, 128
    %576 = vxpose.xlu0.b32.cont [2/16] 0.0, 128
    %577 = vxpose.xlu0.b32.cont [3/16] 0.0, 128
    %578 = vxpose.xlu0.b32.cont [4/16] 0.0, 128
    %579 = vxpose.xlu0.b32.cont [5/16] 0.0, 128
    %580 = vxpose.xlu0.b32.cont [6/16] 0.0, 128
    %581 = vxpose.xlu0.b32.cont [7/16] 0.0, 128
    %582 = vxpose.xlu0.b32.cont [8/16] 0.0, 128
    %583 = vxpose.xlu0.b32.cont [9/16] 0.0, 128
    %584 = vxpose.xlu0.b32.cont [10/16] 0.0, 128
    %585 = vxpose.xlu0.b32.cont [11/16] 0.0, 128
    %586 = vxpose.xlu0.b32.cont [12/16] 0.0, 128
    %587 = vxpose.xlu0.b32.cont [13/16] 0.0, 128
    %588 = vxpose.xlu0.b32.cont [14/16] 0.0, 128
    %589 = vxpose.xlu0.b32.cont [15/16] 0.0, 128
    %590 = vxpose.xlu0.b32.end [16/16] 0.0, 128
    %v591 = vpop.trf.xlu0
    %v592 = vpop.trf.xlu0
    %v593 = vpop.trf.xlu0
    %v594 = vpop.trf.xlu0
    %v595 = vpop.trf.xlu0
    %v596 = vpop.trf.xlu0
    %v597 = vpop.trf.xlu0
    %v598 = vpop.trf.xlu0
    %v599 = vpop.trf.xlu0
    %v600 = vpop.trf.xlu0
    %v601 = vpop.trf.xlu0
    %v602 = vpop.trf.xlu0
    %v603 = vpop.trf.xlu0
    %v604 = vpop.trf.xlu0
    %v605 = vpop.trf.xlu0
    %v606 = vpop.trf.xlu0
    %v608 = vrot.slane %v591, 7
    %vm610 = vcmask 1040384
    %v611 = vsel %vm610, %v555, %v608
    %613 = vrot.lane.b32.xlu0 %v30, 96
    %v614 = vpop.permute.xlu0 %613
    %s615 = vtos %v614
    %v616 = vstv %s615
    %v618 = vadd.f32 %v611, %v616
    %v619 = vperm.slane %v39, 0
    %v621 = vsel %vm97, %v618, 0
    %623 = vmatpush.msra.mxu0 0.0
    %624 = vmatpush.msra.mxu0 0.0
    %625 = vmatpush.msra.mxu0 0.0
    %626 = vmatpush.msra.mxu0 0.0
    %627 = vmatpush.msra.mxu0 0.0
    %628 = vmatpush.msra.mxu0 0.0
    %629 = vmatpush.msra.mxu0 0.0
    %630 = vmatpush.msra.mxu0 0.0
    %631 = vmatpush.msra.mxu0 0.0
    %632 = vmatpush.msra.mxu0 0.0
    %633 = vmatpush.msra.mxu0 0.0
    %634 = vmatpush.msra.mxu0 0.0
    %635 = vmatpush.msra.mxu0 0.0
    %636 = vmatpush.msra.mxu0 0.0
    %637 = vmatpush.msra.mxu0 0.0
    %638 = vmatpush.msra.mxu0 %v38
    %639 = vmatmul.f32.gmra.mxu0 %v621
    %v640 = vpop.f32.mrf.mxu0
    %v641 = vadd.f32 %v619, %v640
    %642 = vdwg.mxu0
    %v643 = vsel %vm64, %v422, 0.0
    %v644 = vsel %vm64, %v423, 0.0
    %645 = vst [vmem:[#allocation5] sm:$0xff] %v643
    %646 = vst [vmem:[#allocation5 + $0x8] sm:$0xff] %v644
    %647 = vrot.lane.b32.xlu0 %v618, 16
    %v648 = vpop.permute.xlu0 %647
    %v650 = vsel %vm219, %v641, %v648
    %v651 = vsel %vm221, %v650, 0.0
    %vm652 = vcmask 1041408
    %v653 = vsel %vm652, %v651, 0.0
    %654 = vst [vmem:[#allocation5 + $0x10] sm:$0xff] %v653
    // Predicated region
    $region14: #{tpu_custom_call.1} parent=1 // pred_check
      _
    $region15: #{tpu_custom_call.1} parent=1 // pred_check_branch
      %656 = sbr.rel (0) target = $region17
    $region16: #{tpu_custom_call.1} parent=1 // pred_region
      %658 = vsyncadd [#allocation4], 0
      %s659 = sshll.u32 [#allocation5], 4
      %s660 = int_to_ptr.vmem [resolvable:$true] %s659
      %s661 = sshll.u32 %s2, 4
      %s662 = int_to_ptr.hbm [resolvable:$true] %s661
      %667 = dma.vmem_to_hbm [thread:$0]  %s660, 384, %s662, [#allocation4], 128, 128, 8
    $region17: #{tpu_custom_call.1} parent=1 // pred_fallthru
      _
    // Predicated region
    $region18: #{tpu_custom_call.1} parent=1 // pred_check
      _
    $region19: #{tpu_custom_call.1} parent=1 // pred_check_branch
      %669 = sbr.rel (0) target = $region21
    $region20: #{tpu_custom_call.1} parent=1 // pred_region
      %671 = dma.done [#allocation4], 384
    $region21: #{tpu_custom_call.1} parent=1 // pred_fallthru
      _
    %672 = vsyncpa [#allocation3], 1
    %673 = vsyncpa [#allocation4], 1

</llo_original>
